<compile_context>
chip_gen: v7x
topology: tpu7x:2x2x1
jax: 0.10.0
libtpu: 0.0.40
codegen_flags: <defaults>
</compile_context>

<pallas_src>
import numpy as np
import jax
import jax.numpy as jnp
from jax import lax
from jax.experimental import pallas as pl
from jax.experimental.pallas import tpu as pltpu


_SMALL_BYTES = 128 * 1024   # at/below this, use the single whole-array block path


def _tpu_defaults():
    """(num_shards, target_block_bytes) tuned per TPU generation."""
    try:
        kind = jax.devices()[0].device_kind.lower()
    except Exception:
        kind = ""
    if "v7" in kind:
        return 2, 8 << 20     # 2 TensorCores/chip, 3.2 TB/s -> 8 MiB blocks
    if "v6" in kind:
        return 1, 8 << 20     # single TC, 1.4 TB/s -> 8 MiB blocks
    if "v5" in kind:
        return 1, 4 << 20     # single TC, 16 MiB default scoped VMEM -> 4 MiB
    return 1, 4 << 20


def _small_sumsq_kernel(z_ref, out_ref):
    """Whole array in one block: square, reduce, broadcast scalar into output."""
    zb = z_ref[...].astype(jnp.float32)
    total = jnp.sum(zb * zb)
    out_ref[...] = jnp.full(out_ref.shape, total, dtype=out_ref.dtype)


def _make_sumsq_kernel(*, total_rows, block_rows, lanes, steps, chunk_rows,
                       needs_mask):
    """Chunked sum-of-squares: accumulate into an (8, lanes) f32 VMEM scratch."""
    n_chunks = block_rows // chunk_rows
    groups = chunk_rows // 8

    def kernel(z_ref, out_ref, acc_ref):
        p = pl.program_id(0)          # shard (parallel) axis
        j = pl.program_id(1)          # reduction axis

        @pl.when(j == 0)
        def _():
            acc_ref[...] = jnp.zeros_like(acc_ref)

        nominal = p * steps + j                  # un-clamped block id
        origin = nominal * block_rows            # first nominal global row

        def accumulate(masked):
            def body(i, carry):
                r0 = pl.multiple_of(i * chunk_rows, chunk_rows)
                chunk = z_ref[pl.ds(r0, chunk_rows), :].astype(jnp.float32)
                if masked:
                    rid = (lax.broadcasted_iota(jnp.int32, (chunk_rows, lanes), 0)
                           + origin + r0)
                    # Mask BEFORE squaring so garbage in the OOB tail of the
                    # boundary block cannot leak into the sum.
                    chunk = jnp.where(rid < total_rows, chunk, 0.0)
                sq = chunk * chunk
                part = sq[0:8, :]
                for g in range(1, groups):       # pure VALU, no XLU
                    part = part + sq[g * 8:(g + 1) * 8, :]
                acc_ref[...] = acc_ref[...] + part
                return carry
            lax.fori_loop(0, n_chunks, body, 0)

        if needs_mask:
            # Only the boundary / clamped blocks pay the per-element mask cost.
            @pl.when(origin + block_rows <= total_rows)
            def _():
                accumulate(False)

            @pl.when(origin + block_rows > total_rows)
            def _():
                accumulate(True)
        else:
            accumulate(False)

        @pl.when(j == steps - 1)
        def _():
            out_ref[...] = acc_ref[...]

    return kernel


def _sum_of_squares(z2d, *, num_shards, target_block_bytes, block_rows=None):
    """Global sum(z^2) over a 2-D view, via Pallas."""
    R, C = z2d.shape
    itemsize = z2d.dtype.itemsize
    T = R * C

    cost = pl.CostEstimate(flops=2 * T, transcendentals=0,
                           bytes_accessed=int(T * itemsize + 8 * C * 4))

    # ---- tiny inputs: one block == full array dims (always layout-legal) ----
    if R < 8 or R * C * itemsize <= _SMALL_BYTES:
        partials = pl.pallas_call(
            _small_sumsq_kernel,
            out_shape=jax.ShapeDtypeStruct((8, 128), jnp.float32),
            grid_spec=pltpu.PrefetchScalarGridSpec(
                num_scalar_prefetch=0,
                grid=(1,),
                in_specs=[pl.BlockSpec((R, C), lambda i: (0, 0))],
                out_specs=pl.BlockSpec((8, 128), lambda i: (0, 0)),
            ),
            compiler_params=pltpu.CompilerParams(
                dimension_semantics=("arbitrary",)),
            cost_estimate=cost,
        )(z2d)
        return partials[0, 0]

    # ---- pipelined, (optionally) core-sharded path ---------------------------
    budget_rows = max(8, (target_block_bytes // (C * itemsize)) // 8 * 8)
    if block_rows is None:
        br = min(R // 8 * 8, budget_rows)
        if num_shards > 1:
            # Balance so every TensorCore gets at least one block of work.
            per_shard = -(-R // num_shards)
            per_shard = -(-per_shard // 8) * 8
            br = min(br, max(8, per_shard))
    else:
        br = max(8, min(block_rows // 8 * 8, R // 8 * 8))
    br = max(8, br)

    chunk_rows = 32 if br % 32 == 0 else (16 if br % 16 == 0 else 8)
    needed = -(-R // br)                       # blocks that actually hold data
    P = max(1, min(int(num_shards), needed))   # shard (megacore) axis extent
    S = -(-needed // P)                        # reduction steps per shard
    needs_mask = (P * S * br != R)             # static: any OOB rows at all?
    clamp = (P * S > needed)                   # static: fully-OOB nominal blocks?

    if clamp:
        # Keep every DMA in bounds; the kernel masks by the nominal row index.
        def in_index(p, j):
            return (jnp.minimum(p * S + j, needed - 1), 0)
    else:
        def in_index(p, j):
            return (p * S + j, 0)

    kernel = _make_sumsq_kernel(total_rows=R, block_rows=br, lanes=C,
                                steps=S, chunk_rows=chunk_rows,
                                needs_mask=needs_mask)

    block_bytes = br * C * itemsize
    vmem_limit = int(min(max(2 * block_bytes + (16 << 20), 32 << 20), 48 << 20))
    # TODO(synk): pathological shapes with a single enormous, 128-indivisible
    # feature dim (C very large) would need column tiling as well; not needed
    # for RealNVP-style inputs.

    partials = pl.pallas_call(
        kernel,
        out_shape=jax.ShapeDtypeStruct((P * 8, C), jnp.float32),
        grid_spec=pltpu.PrefetchScalarGridSpec(
            num_scalar_prefetch=0,
            grid=(P, S),
            in_specs=[pl.BlockSpec((br, C), in_index)],
            out_specs=pl.BlockSpec((8, C), lambda p, j: (p, 0)),
            scratch_shapes=[pltpu.VMEM((8, C), jnp.float32)],
        ),
        compiler_params=pltpu.CompilerParams(
            dimension_semantics=("parallel", "arbitrary"),
            vmem_limit_bytes=vmem_limit,
        ),
        cost_estimate=cost,
    )(z2d)
    return jnp.sum(partials)


def nll_loss(z, sldj, k=256, *, block_rows=None, num_shards=None):
    """z: (N, C, H, W) float32/bfloat16; sldj: (N,) float. Returns scalar f32."""
    N = z.shape[0]
    D = int(np.prod(z.shape[1:]))
    T = N * D

    shards_default, target_block_bytes = _tpu_defaults()
    if num_shards is None:
        num_shards = shards_default

    # Free (bitcast) lane-dense 2-D view -- no jnp.pad, no extra HBM copy of z.
    lanes = next((c for c in (1024, 512, 256, 128) if T % c == 0), D)
    z2d = z.reshape(T // lanes, lanes)

    sumsq = _sum_of_squares(z2d, num_shards=num_shards,
                            target_block_bytes=target_block_bytes,
                            block_rows=block_rows)

    # O(N)/O(1) epilogue stays in plain JAX (negligible work).
    log2pi = float(np.log(2.0 * np.pi))
    logk = float(np.log(k))
    sldj_mean = jnp.mean(sldj.astype(jnp.float32))
    nll = 0.5 * sumsq / N + (0.5 * log2pi + logk) * D - sldj_mean
    return nll.astype(jnp.float32)


def nll_loss_ref(z, sldj, k=256):
    """Plain-JAX reference matching the PyTorch module exactly."""
    D = int(np.prod(z.shape[1:]))
    zf = z.astype(jnp.float32)
    prior_ll = -0.5 * (zf ** 2 + np.log(2 * np.pi))
    prior_ll = prior_ll.reshape(z.shape[0], -1).sum(-1) - np.log(k) * D
    ll = prior_ll + sldj.astype(jnp.float32)
    return -ll.mean()


if __name__ == "__main__":
    master_key = jax.random.PRNGKey(0)

    def run_case(case_key, shape, dtype=jnp.float32, **kw):
        kz, ks = jax.random.split(case_key)
        z = jax.random.normal(kz, shape, dtype=jnp.float32).astype(dtype)
        sldj = jax.random.normal(ks, (shape[0],), dtype=jnp.float32)
        got = jax.block_until_ready(nll_loss(z, sldj, k=256, **kw))
        ref = jax.block_until_ready(nll_loss_ref(z, sldj, k=256))
        np.testing.assert_allclose(np.asarray(got), np.asarray(ref),
                                   rtol=1e-5, atol=1e-3)

    keys = jax.random.split(master_key, 3)
    # Primary small case consistent with the module (single-block path).
    run_case(keys[0], (2, 4, 16, 16))
    # Chunked, pipelined path with bf16 input (in-VMEM upcast).
    run_case(keys[1], (24, 4, 32, 32), dtype=jnp.bfloat16)
    # Two shards + ragged boundary: exercises in-kernel tail masking and the
    # clamped index_map for the fully-out-of-range nominal block.
    run_case(keys[2], (30, 4, 32, 32), block_rows=48, num_shards=2)

    print("KERNEL_OK")
</pallas_src>

<mosaic_0001>
module attributes {stable_mosaic.version = 11 : i64} {
  func.func @_small_sumsq_kernel(%arg0: i32, %arg1: memref<2x1024xf32, #tpu.memory_space<vmem>>, %arg2: memref<8x128xf32, #tpu.memory_space<vmem>>) attributes {dimension_semantics = [#tpu.dimension_semantics<arbitrary>], iteration_bounds = array<i64: 1>, scalar_prefetch = 0 : i64, scratch_operands = 0 : i64, tpu.core_type = #tpu.core_type<tc>, window_params = [{pipeline_mode = #tpu.pipeline_mode<synchronous>, transform_indices = @transform_0, window_bounds = array<i64: 2, 1024>}, {pipeline_mode = #tpu.pipeline_mode<synchronous>, transform_indices = @transform_1, window_bounds = array<i64: 8, 128>}]} {
    %c0 = arith.constant 0 : index
    %c0_0 = arith.constant 0 : index
    %0 = vector.load %arg1[%c0, %c0_0] : memref<2x1024xf32, #tpu.memory_space<vmem>>, vector<2x1024xf32>
    %1 = arith.mulf %0, %0 : vector<2x1024xf32>
    %2 = vector.shape_cast %1 : vector<2x1024xf32> to vector<1x2x1024xf32>
    %cst = arith.constant dense<0.000000e+00> : vector<1xf32>
    %3 = vector.multi_reduction <add>, %2, %cst [1, 2] : vector<1x2x1024xf32> to vector<1xf32>
    %4 = vector.shape_cast %3 : vector<1xf32> to vector<1x1x1xf32>
    %5 = vector.extract %4[0, 0, 0] : f32 from vector<1x1x1xf32>
    %6 = vector.broadcast %5 : f32 to vector<8x128xf32>
    %c0_1 = arith.constant 0 : index
    %c0_2 = arith.constant 0 : index
    %7 = vector.load %arg2[%c0_1, %c0_2] : memref<8x128xf32, #tpu.memory_space<vmem>>, vector<8x128xf32>
    tpu.vector_store %arg2[%c0_1, %c0_2], %6 {strides = array<i32>} : memref<8x128xf32, #tpu.memory_space<vmem>>, vector<8x128xf32>,
    return
  }
  func.func @transform_0(%arg0: i32) -> (i32, i32) {
    %c0_i32 = arith.constant 0 : i32
    %c0_i32_0 = arith.constant 0 : i32
    %c0_i32_1 = arith.constant 0 : i32
    return %c0_i32, %c0_i32_0 : i32, i32
  }
  func.func @transform_1(%arg0: i32) -> (i32, i32) {
    %c0_i32 = arith.constant 0 : i32
    %c0_i32_0 = arith.constant 0 : i32
    %c0_i32_1 = arith.constant 0 : i32
    return %c0_i32, %c0_i32_0 : i32, i32
  }
}

</mosaic_0001>

<llo_original>
// kernel: tpu_custom_call.1
$region0: #{tpu_custom_call.1}
  #allocation0 [shape = 'u32[]', space=smem, size = 0x4, offset = 0x4, fixed_abs, tag = 'smem constant byte address 0x4 - core index']
  #allocation1 [shape = 'u32[144,128]{1,0:T(1,128)}', space=vmem, size = 0x12000, scoped, tag = 'internal scratch']
  %s0 = inlined_call_operand.hbm [shape: f32[2,1024], index: 0, kind: input, shape index: {}]
  %s1 = inlined_call_operand.hbm [shape: f32[8,128], index: 1, kind: output, shape index: {}]
  %s2 = sld [smem:[#allocation0]]
  $region18: #{tpu_custom_call.1} parent=0
    _
  %s4 = ssub.s32 1, %s2
  %s5 = scalar_select 0, %s4, %s2
  $region1: #{tpu_custom_call.1} parent=0
    #allocation2 [shape = 'u8[8192]{0}', space=vmem, size = 0x2000, scoped, tag = 'input window, operand 0, single buffered']
    #allocation3 [shape = 's32[1]{0}', space=sflag, size = 0x4, scoped, tag = 'scoped memory for tpu_custom_call.1']
    #allocation4 [shape = 's32[1]{0}', space=sflag, size = 0x4, scoped, tag = 'scoped memory for tpu_custom_call.1']
    #allocation5 [shape = 'u8[4096]{0}', space=vmem, size = 0x1000, scoped, tag = 'output window, operand 0, single buffered']
    %6 = vsyncpa [#allocation3], 0
    %7 = vsyncpa [#allocation4], 0
    // Predicated region
    $region2: #{tpu_custom_call.1} parent=1 // pred_check
      _
    $region3: #{tpu_custom_call.1} parent=1 // pred_check_branch
      %9 = sbr.rel (0) target = $region5
    $region4: #{tpu_custom_call.1} parent=1 // pred_region
      %s11 = ssub.s32 256, 256
      %12 = vsyncadd [#allocation3], %s11
      %s14 = sshll.u32 [#allocation2], 4
      %s15 = int_to_ptr.vmem [resolvable:$true] %s14
      %17 = dma.hbm_to_vmem [thread:$0]  %s0, 256, %s15, [#allocation3]
    $region5: #{tpu_custom_call.1} parent=1 // pred_fallthru
      _
    // Predicated region
    $region6: #{tpu_custom_call.1} parent=1 // pred_check
      _
    $region7: #{tpu_custom_call.1} parent=1 // pred_check_branch
      %19 = sbr.rel (0) target = $region9
    $region8: #{tpu_custom_call.1} parent=1 // pred_region
      %20 = dma.done [#allocation3], 256
    $region9: #{tpu_custom_call.1} parent=1 // pred_fallthru
      _
    %v21 = vld [vmem:[#allocation2] sm:$0xff]
    %v22 = vld [vmem:[#allocation2 + $0x8] sm:$0xff]
    %v23 = vmul.f32 %v21, %v21
    %v24 = vmul.f32 %v22, %v22
    %v27 = vcombine.high %v23, %v23
    %v29 = vunpack.c.l.s4 1983009808
    %v30 = vunpack.c.0.s8 %v29
    %v31 = vlaneseq
    %v32 = vshrl.u32 %v31, 7
    %v33 = vsub.s32 %v30, %v32
    %v34 = vrot.slane %v23, %v33
    %v36 = vunpack.c.l.s4 1983009808
    %v37 = vunpack.c.0.s8 %v36
    %v38 = vlaneseq
    %v39 = vshrl.u32 %v38, 7
    %v40 = vsub.s32 %v37, %v39
    %v41 = vrot.slane %v27, %v40
    %v42 = vcombine.high %v34, %v34
    %v43 = vcombine.high %v41, %v41
    %v44 = vcombine.high %v24, %v24
    %v46 = vunpack.c.l.s4 1983009808
    %v47 = vunpack.c.0.s8 %v46
    %v48 = vlaneseq
    %v49 = vshrl.u32 %v48, 7
    %v50 = vsub.s32 %v47, %v49
    %v51 = vrot.slane %v24, %v50
    %v53 = vunpack.c.l.s4 1983009808
    %v54 = vunpack.c.0.s8 %v53
    %v55 = vlaneseq
    %v56 = vshrl.u32 %v55, 7
    %v57 = vsub.s32 %v54, %v56
    %v58 = vrot.slane %v44, %v57
    %v59 = vcombine.high %v51, %v51
    %v60 = vcombine.high %v58, %v58
    %vm69 = vcmask 1041408
    %v70 = vsel %vm69, %v34, 0.0
    %v71 = vsel %vm69, %v42, 0.0
    %v72 = vadd.f32 %v70, %v71
    %v73 = vsel %vm69, %v41, 0.0
    %v74 = vadd.f32 %v72, %v73
    %v75 = vsel %vm69, %v43, 0.0
    %v76 = vadd.f32 %v74, %v75
    %v77 = vsel %vm69, %v51, 0.0
    %v78 = vadd.f32 %v76, %v77
    %v79 = vsel %vm69, %v59, 0.0
    %v80 = vadd.f32 %v78, %v79
    %v81 = vsel %vm69, %v58, 0.0
    %v82 = vadd.f32 %v80, %v81
    %v83 = vsel %vm69, %v60, 0.0
    %v84 = vadd.f32 %v82, %v83
    %85 = vadd.xlane.f32.xlu0 %v84
    %v86 = vpop.xlane.xlu0 %85
    %v87 = vrot.slane %v86, 4
    %v88 = vadd.f32 %v86, %v87
    %v89 = vrot.slane %v88, 2
    %v90 = vadd.f32 %v88, %v89
    %v91 = vrot.slane %v90, 1
    %v92 = vadd.f32 %v90, %v91
    %s93 = vtos %v92
    %v94 = vstv %s93
    %95 = vst [vmem:[#allocation5] sm:$0xff] %v94
    // Predicated region
    $region10: #{tpu_custom_call.1} parent=1 // pred_check
      _
    $region11: #{tpu_custom_call.1} parent=1 // pred_check_branch
      %97 = sbr.rel (0) target = $region13
    $region12: #{tpu_custom_call.1} parent=1 // pred_region
      %s99 = ssub.s32 128, 128
      %100 = vsyncadd [#allocation4], %s99
      %s102 = sshll.u32 [#allocation5], 4
      %s103 = int_to_ptr.vmem [resolvable:$true] %s102
      %105 = dma.vmem_to_hbm [thread:$0]  %s103, 128, %s1, [#allocation4]
    $region13: #{tpu_custom_call.1} parent=1 // pred_fallthru
      _
    // Predicated region
    $region14: #{tpu_custom_call.1} parent=1 // pred_check
      _
    $region15: #{tpu_custom_call.1} parent=1 // pred_check_branch
      %107 = sbr.rel (0) target = $region17
    $region16: #{tpu_custom_call.1} parent=1 // pred_region
      %108 = dma.done [#allocation4], 128
    $region17: #{tpu_custom_call.1} parent=1 // pred_fallthru
      _
    %109 = vsyncpa [#allocation3], 1
    %110 = vsyncpa [#allocation4], 1

</llo_original>
